<compile_context>
chip_gen: v5e
topology: v5e:2x2
jax: 0.10.0
libtpu: 0.0.40
codegen_flags: <defaults>
</compile_context>

<pallas_src>
import jax
import jax.numpy as jnp
from jax.experimental import pallas as pl
from jax.experimental.pallas import tpu as pltpu

IN_FEATURES = 32
HIDDEN = 64
PACK = 4  # 32 * 4 = 128 lanes -> one full vreg row per packed x row


def _classifier_kernel(x_ref, w1_ref, b1_ref, w2_ref, b2_ref, o_ref):
    # x_ref : [TBP, 32*P]   (P batch rows packed per lane-dense row)
    # w1_ref: [32*P, 64*P]  block-diagonal copies of w1
    # b1_ref: [1, 64*P]     b1 tiled P times
    # w2_ref: [64*P, C*P]   block-diagonal copies of w2
    # b2_ref: [1, C*P]      b2 tiled P times
    # o_ref : [TBP, C*P]
    # Linear(32 -> 64) + ReLU, f32 accumulation regardless of input dtype.
    h = jnp.dot(x_ref[...], w1_ref[...], preferred_element_type=jnp.float32)
    h = h + b1_ref[...]              # broadcast bias (VPU)
    h = jnp.maximum(h, 0.0)          # ReLU (VPU)
    # Linear(64 -> C).  Cast activations to the weight dtype so bf16 weights
    # keep the fast bf16 MXU path; accumulate in f32.
    out = jnp.dot(h.astype(w2_ref.dtype), w2_ref[...],
                  preferred_element_type=jnp.float32)
    o_ref[...] = (out + b2_ref[...]).astype(o_ref.dtype)


def _round_up(n, m):
    return ((n + m - 1) // m) * m


def _block_diag(w, p):
    # kron(I_p, w) -> block-diagonal matrix with p copies of w.
    return jnp.kron(jnp.eye(p, dtype=w.dtype), w)


def classifier_forward(x, w1, b1, w2, b2, *, tile_batch=32768):
    """logits = relu(x @ w1 + b1) @ w2 + b2.

    x: [B, 32]; w1: [32, 64]; b1: [1, 64]; w2: [64, C]; b2: [1, C]
    (weights pre-transposed vs. PyTorch's [out, in]).  Returns f32 [B, C].
    """
    B, in_f = x.shape
    assert in_f == IN_FEATURES and w1.shape == (IN_FEATURES, HIDDEN)
    num_classes = w2.shape[1]
    p = PACK

    # bf16 packs 2 rows/sublane -> packed-row tiles must be a multiple of 16
    # (16 also covers the f32 output's 8-sublane requirement).
    sub = 16 if x.dtype == jnp.bfloat16 else 8

    # Packed layout: P consecutive batch rows -> one lane-dense row of 32*P.
    rows_p = _round_up(pl.cdiv(max(B, 1), p), sub)          # packed rows needed
    tbp = _round_up(max(1, min(tile_batch // p, rows_p)), sub)
    grid_b = pl.cdiv(rows_p, tbp)
    rows_p_pad = grid_b * tbp
    b_pad = rows_p_pad * p
    if b_pad != B:
        x = jnp.pad(x, ((0, b_pad - B), (0, 0)))
    # Free row-major reshape (no data movement): (b_pad, 32) -> (b_pad/P, 32P).
    x_packed = x.reshape(rows_p_pad, p * in_f)

    # Block-diagonal weights / tiled biases (<= ~150 KiB extra HBM, one-time).
    w1_bd = _block_diag(w1, p)                               # [32P, 64P]
    w2_bd = _block_diag(w2, p)                               # [64P, CP]
    b1_t = jnp.tile(b1.reshape(1, HIDDEN), (1, p))           # [1, 64P]
    b2_t = jnp.tile(b2.reshape(1, num_classes), (1, p))      # [1, CP]

    # Advisory cost (effective work, not the block-diagonal padded FLOPs).
    cost = pl.CostEstimate(
        flops=2 * b_pad * (IN_FEATURES * HIDDEN + HIDDEN * num_classes),
        transcendentals=0,
        bytes_accessed=(
            b_pad * IN_FEATURES * x.dtype.itemsize           # read x
            + b_pad * num_classes * 4                        # write logits (f32)
            + w1_bd.size * w1_bd.dtype.itemsize
            + w2_bd.size * w2_bd.dtype.itemsize
            + (b1_t.size + b2_t.size) * b1_t.dtype.itemsize
        ),
    )

    # Real VMEM footprint with 128-lane padding, double-buffered x/out plus
    # the h / cast temporaries; clamp below v7x's 64 MiB physical VMEM.
    def _pad_lane(n):
        return _round_up(n, 128)

    x_tile = tbp * _pad_lane(p * in_f) * x.dtype.itemsize
    out_tile = tbp * _pad_lane(p * num_classes) * 4
    h_tile = tbp * _pad_lane(p * HIDDEN) * 4
    w_bytes = (w1_bd.size * w1_bd.dtype.itemsize
               + w2_bd.size * w2_bd.dtype.itemsize
               + (b1_t.size + b2_t.size) * 4)
    vmem_need = 2 * x_tile + 2 * out_tile + 2 * h_tile + 2 * w_bytes
    vmem_limit = int(min(56 << 20, max(32 << 20, int(vmem_need * 1.25))))

    out_packed = pl.pallas_call(
        _classifier_kernel,
        out_shape=jax.ShapeDtypeStruct((rows_p_pad, p * num_classes),
                                       jnp.float32),
        grid_spec=pltpu.PrefetchScalarGridSpec(
            num_scalar_prefetch=0,
            grid=(grid_b,),
            in_specs=[
                # x streams one (tbp, 32P) lane-dense tile per grid step.
                pl.BlockSpec((tbp, p * in_f), lambda i: (i, 0)),
                # Weights / biases: constant index_map -> VMEM-resident.
                pl.BlockSpec(w1_bd.shape, lambda i: (0, 0)),
                pl.BlockSpec(b1_t.shape, lambda i: (0, 0)),
                pl.BlockSpec(w2_bd.shape, lambda i: (0, 0)),
                pl.BlockSpec(b2_t.shape, lambda i: (0, 0)),
            ],
            out_specs=pl.BlockSpec((tbp, p * num_classes), lambda i: (i, 0)),
        ),
        compiler_params=pltpu.CompilerParams(
            # Batch rows are independent -> v7x's 2 TensorCores split the grid;
            # neutral on v5e/v6e.
            dimension_semantics=("parallel",),
            vmem_limit_bytes=vmem_limit,
        ),
        cost_estimate=cost,
    )(x_packed, w1_bd, b1_t, w2_bd, b2_t)

    # Free reshape back to (b_pad, C), then drop the padded rows.
    out = out_packed.reshape(b_pad, num_classes)
    return out if b_pad == B else out[:B]


def init_params(key, num_classes=2, dtype=jnp.float32):
    """Mirror PyTorch nn.Linear default init: U(-1/sqrt(fan_in), +1/sqrt(fan_in)).
    Weights stored as [in, out] (transposed vs. PyTorch's [out, in])."""
    k1, k2, k3, k4 = jax.random.split(key, 4)
    bound1 = 1.0 / jnp.sqrt(32.0)
    bound2 = 1.0 / jnp.sqrt(64.0)
    w1 = jax.random.uniform(k1, (32, 64), dtype, -bound1, bound1)
    b1 = jax.random.uniform(k2, (1, 64), jnp.float32, -bound1, bound1)
    w2 = jax.random.uniform(k3, (64, num_classes), dtype, -bound2, bound2)
    b2 = jax.random.uniform(k4, (1, num_classes), jnp.float32, -bound2, bound2)
    return w1, b1, w2, b2


def _ref_forward(x, w1, b1, w2, b2):
    """Pure-JAX reference mirroring the kernel's mixed-precision path."""
    h = jnp.dot(x, w1, preferred_element_type=jnp.float32) + b1
    h = jnp.maximum(h, 0.0)
    return jnp.dot(h.astype(w2.dtype), w2,
                   preferred_element_type=jnp.float32) + b2


if __name__ == "__main__":
    key = jax.random.PRNGKey(0)
    k_x, k_p = jax.random.split(key)
    num_classes = 2

    w1, b1, w2, b2 = init_params(k_p, num_classes=num_classes)

    # 1) Tiny batch (single grid step, heavy padding path).
    x_small = jax.random.normal(k_x, (8, 32), dtype=jnp.float32)
    out = jax.block_until_ready(classifier_forward(x_small, w1, b1, w2, b2))
    assert out.shape == (8, num_classes)
    assert jnp.allclose(out, _ref_forward(x_small, w1, b1, w2, b2),
                        atol=1e-5, rtol=1e-5)

    # 2) Ragged batch with a small tile -> exercises pad + multi-step grid
    #    (50 rows -> 64 padded, 2 grid steps of 8 packed rows each).
    x_rag = jax.random.normal(k_x, (50, 32), dtype=jnp.float32)
    out_r = jax.block_until_ready(
        classifier_forward(x_rag, w1, b1, w2, b2, tile_batch=16))
    assert out_r.shape == (50, num_classes)
    assert jnp.allclose(out_r, _ref_forward(x_rag, w1, b1, w2, b2),
                        atol=1e-5, rtol=1e-5)

    # 3) bf16 feeds (production path: caller supplies bf16; no wrapper cast).
    #    Exercises the 16-sublane packed-row rounding for bf16.
    x_bf = x_rag.astype(jnp.bfloat16)
    w1_bf = w1.astype(jnp.bfloat16)
    w2_bf = w2.astype(jnp.bfloat16)
    out_bf = jax.block_until_ready(
        classifier_forward(x_bf, w1_bf, b1, w2_bf, b2, tile_batch=16))
    ref_bf = _ref_forward(x_bf, w1_bf, b1, w2_bf, b2)
    assert out_bf.shape == (50, num_classes)
    assert jnp.allclose(out_bf, ref_bf, atol=2e-2, rtol=2e-2)

    print("KERNEL_OK")
</pallas_src>

<mosaic_0001>
module attributes {stable_mosaic.version = 11 : i64} {
  func.func @_classifier_kernel(%arg0: i32, %arg1: memref<8x128xf32, #tpu.memory_space<vmem>>, %arg2: memref<128x256xf32, #tpu.memory_space<vmem>>, %arg3: memref<1x256xf32, #tpu.memory_space<vmem>>, %arg4: memref<256x8xf32, #tpu.memory_space<vmem>>, %arg5: memref<1x8xf32, #tpu.memory_space<vmem>>, %arg6: memref<8x8xf32, #tpu.memory_space<vmem>>) attributes {dimension_semantics = [#tpu.dimension_semantics<parallel>], iteration_bounds = array<i64: 1>, scalar_prefetch = 0 : i64, scratch_operands = 0 : i64, tpu.core_type = #tpu.core_type<tc>, window_params = [{transform_indices = @transform_0, window_bounds = array<i64: 8, 128>}, {pipeline_mode = #tpu.pipeline_mode<synchronous>, transform_indices = @transform_1, window_bounds = array<i64: 128, 256>}, {pipeline_mode = #tpu.pipeline_mode<synchronous>, transform_indices = @transform_2, window_bounds = array<i64: 1, 256>}, {pipeline_mode = #tpu.pipeline_mode<synchronous>, transform_indices = @transform_3, window_bounds = array<i64: 256, 8>}, {pipeline_mode = #tpu.pipeline_mode<synchronous>, transform_indices = @transform_4, window_bounds = array<i64: 1, 8>}, {transform_indices = @transform_5, window_bounds = array<i64: 8, 8>}]} {
    %c0 = arith.constant 0 : index
    %c0_0 = arith.constant 0 : index
    %0 = vector.load %arg1[%c0, %c0_0] : memref<8x128xf32, #tpu.memory_space<vmem>>, vector<8x128xf32>
    %c0_1 = arith.constant 0 : index
    %c0_2 = arith.constant 0 : index
    %1 = vector.load %arg2[%c0_1, %c0_2] : memref<128x256xf32, #tpu.memory_space<vmem>>, vector<128x256xf32>
    %cst = arith.constant dense<0.000000e+00> : vector<8x256xf32>
    %2 = tpu.matmul %0, %1, %cst {dimension_numbers = #tpu.dot_dimension_numbers<[1], [0], [0], [1], [0, 0, 1, 1], [], []>} : vector<8x128xf32>, vector<128x256xf32>, vector<8x256xf32> -> vector<8x256xf32>
    %c0_3 = arith.constant 0 : index
    %c0_4 = arith.constant 0 : index
    %3 = vector.load %arg3[%c0_3, %c0_4] : memref<1x256xf32, #tpu.memory_space<vmem>>, vector<1x256xf32>
    %4 = vector.broadcast %3 : vector<1x256xf32> to vector<8x256xf32>
    %5 = arith.addf %2, %4 : vector<8x256xf32>
    %cst_5 = arith.constant 0.000000e+00 : f32
    %6 = vector.broadcast %cst_5 : f32 to vector<8x256xf32>
    %7 = arith.maximumf %5, %6 : vector<8x256xf32>
    %c0_6 = arith.constant 0 : index
    %c0_7 = arith.constant 0 : index
    %8 = vector.load %arg4[%c0_6, %c0_7] : memref<256x8xf32, #tpu.memory_space<vmem>>, vector<256x8xf32>
    %cst_8 = arith.constant dense<0.000000e+00> : vector<8x8xf32>
    %9 = tpu.matmul %7, %8, %cst_8 {dimension_numbers = #tpu.dot_dimension_numbers<[1], [0], [0], [1], [0, 0, 1, 1], [], []>} : vector<8x256xf32>, vector<256x8xf32>, vector<8x8xf32> -> vector<8x8xf32>
    %c0_9 = arith.constant 0 : index
    %c0_10 = arith.constant 0 : index
    %10 = vector.load %arg5[%c0_9, %c0_10] : memref<1x8xf32, #tpu.memory_space<vmem>>, vector<1x8xf32>
    %11 = vector.broadcast %10 : vector<1x8xf32> to vector<8x8xf32>
    %12 = arith.addf %9, %11 : vector<8x8xf32>
    %c0_11 = arith.constant 0 : index
    %c0_12 = arith.constant 0 : index
    %13 = vector.load %arg6[%c0_11, %c0_12] : memref<8x8xf32, #tpu.memory_space<vmem>>, vector<8x8xf32>
    tpu.vector_store %arg6[%c0_11, %c0_12], %12 {strides = array<i32>} : memref<8x8xf32, #tpu.memory_space<vmem>>, vector<8x8xf32>,
    return
  }
  func.func @transform_0(%arg0: i32) -> (i32, i32) {
    %c0_i32 = arith.constant 0 : i32
    %c0_i32_0 = arith.constant 0 : i32
    return %arg0, %c0_i32 : i32, i32
  }
  func.func @transform_1(%arg0: i32) -> (i32, i32) {
    %c0_i32 = arith.constant 0 : i32
    %c0_i32_0 = arith.constant 0 : i32
    %c0_i32_1 = arith.constant 0 : i32
    return %c0_i32, %c0_i32_0 : i32, i32
  }
  func.func @transform_2(%arg0: i32) -> (i32, i32) {
    %c0_i32 = arith.constant 0 : i32
    %c0_i32_0 = arith.constant 0 : i32
    %c0_i32_1 = arith.constant 0 : i32
    return %c0_i32, %c0_i32_0 : i32, i32
  }
  func.func @transform_3(%arg0: i32) -> (i32, i32) {
    %c0_i32 = arith.constant 0 : i32
    %c0_i32_0 = arith.constant 0 : i32
    %c0_i32_1 = arith.constant 0 : i32
    return %c0_i32, %c0_i32_0 : i32, i32
  }
  func.func @transform_4(%arg0: i32) -> (i32, i32) {
    %c0_i32 = arith.constant 0 : i32
    %c0_i32_0 = arith.constant 0 : i32
    %c0_i32_1 = arith.constant 0 : i32
    return %c0_i32, %c0_i32_0 : i32, i32
  }
  func.func @transform_5(%arg0: i32) -> (i32, i32) {
    %c0_i32 = arith.constant 0 : i32
    %c0_i32_0 = arith.constant 0 : i32
    return %arg0, %c0_i32 : i32, i32
  }
}

</mosaic_0001>

<llo_original>
// kernel: tpu_custom_call.1
$region0: #{tpu_custom_call.1}
  #allocation0 [shape = 'u32[]', space=smem, size = 0x4, offset = 0x4, fixed_abs, tag = 'smem constant byte address 0x4 - core index']
  #allocation1 [shape = 'u32[72,128]{1,0:T(1,128)}', space=vmem, size = 0x9000, scoped, tag = 'internal scratch']
  %s0 = inlined_call_operand.vmem [shape: f32[8,128], index: 0, kind: input, shape index: {}]
  %s1 = inlined_call_operand.vmem [shape: f32[128,256], index: 1, kind: input, shape index: {}]
  %s2 = inlined_call_operand.vmem [shape: f32[1,256], index: 2, kind: input, shape index: {}]
  %s3 = inlined_call_operand.vmem [shape: f32[256,8], index: 3, kind: input, shape index: {}]
  %s4 = inlined_call_operand.vmem [shape: f32[1,8], index: 4, kind: input, shape index: {}]
  %s5 = inlined_call_operand.hbm [shape: f32[8,8], index: 5, kind: output, shape index: {}]
  %s6 = sld [smem:[#allocation0]]
  $region30: #{tpu_custom_call.1} parent=0
    _
  %s8 = ssub.s32 1, %s6
  %s9 = scalar_select 0, %s8, %s6
  $region1: #{tpu_custom_call.1} parent=0
    #allocation2 [shape = 'u8[4096]{0}', space=vmem, size = 0x1000, scoped, tag = 'output window, operand 0, single buffered']
    #allocation3 [shape = 's32[1]{0}', space=sflag, size = 0x4, scoped, tag = 'scoped memory for tpu_custom_call.1']
    %10 = vsyncpa [#allocation3], 0
    // Predicated region
    $region2: #{tpu_custom_call.1} parent=1 // pred_check
      _
    $region3: #{tpu_custom_call.1} parent=1 // pred_check_branch
      %12 = sbr.rel (0) target = $region5
    $region4: #{tpu_custom_call.1} parent=1 // pred_region
      _
    $region5: #{tpu_custom_call.1} parent=1 // pred_fallthru
      _
    // Predicated region
    $region6: #{tpu_custom_call.1} parent=1 // pred_check
      _
    $region7: #{tpu_custom_call.1} parent=1 // pred_check_branch
      %14 = sbr.rel (0) target = $region9
    $region8: #{tpu_custom_call.1} parent=1 // pred_region
      _
    $region9: #{tpu_custom_call.1} parent=1 // pred_fallthru
      _
    // Predicated region
    $region10: #{tpu_custom_call.1} parent=1 // pred_check
      _
    $region11: #{tpu_custom_call.1} parent=1 // pred_check_branch
      %16 = sbr.rel (0) target = $region13
    $region12: #{tpu_custom_call.1} parent=1 // pred_region
      _
    $region13: #{tpu_custom_call.1} parent=1 // pred_fallthru
      _
    // Predicated region
    $region14: #{tpu_custom_call.1} parent=1 // pred_check
      _
    $region15: #{tpu_custom_call.1} parent=1 // pred_check_branch
      %18 = sbr.rel (0) target = $region17
    $region16: #{tpu_custom_call.1} parent=1 // pred_region
      _
    $region17: #{tpu_custom_call.1} parent=1 // pred_fallthru
      _
    // Predicated region
    $region18: #{tpu_custom_call.1} parent=1 // pred_check
      _
    $region19: #{tpu_custom_call.1} parent=1 // pred_check_branch
      %20 = sbr.rel (0) target = $region21
    $region20: #{tpu_custom_call.1} parent=1 // pred_region
      _
    $region21: #{tpu_custom_call.1} parent=1 // pred_fallthru
      _
    %v21 = vld [vmem:[%s0] sm:$0xff]
    %v22 = vld [vmem:[%s1] sm:$0xff]
    %v23 = vld [vmem:[%s1 + $0x8] sm:$0xff]
    %v24 = vld [vmem:[%s1 + $0x10] sm:$0xff]
    %v25 = vld [vmem:[%s1 + $0x18] sm:$0xff]
    %v26 = vld [vmem:[%s1 + $0x20] sm:$0xff]
    %v27 = vld [vmem:[%s1 + $0x28] sm:$0xff]
    %v28 = vld [vmem:[%s1 + $0x30] sm:$0xff]
    %v29 = vld [vmem:[%s1 + $0x38] sm:$0xff]
    %v30 = vld [vmem:[%s1 + $0x40] sm:$0xff]
    %v31 = vld [vmem:[%s1 + $0x48] sm:$0xff]
    %v32 = vld [vmem:[%s1 + $0x50] sm:$0xff]
    %v33 = vld [vmem:[%s1 + $0x58] sm:$0xff]
    %v34 = vld [vmem:[%s1 + $0x60] sm:$0xff]
    %v35 = vld [vmem:[%s1 + $0x68] sm:$0xff]
    %v36 = vld [vmem:[%s1 + $0x70] sm:$0xff]
    %v37 = vld [vmem:[%s1 + $0x78] sm:$0xff]
    %v38 = vld [vmem:[%s1 + $0x80] sm:$0xff]
    %v39 = vld [vmem:[%s1 + $0x88] sm:$0xff]
    %v40 = vld [vmem:[%s1 + $0x90] sm:$0xff]
    %v41 = vld [vmem:[%s1 + $0x98] sm:$0xff]
    %v42 = vld [vmem:[%s1 + $0xa0] sm:$0xff]
    %v43 = vld [vmem:[%s1 + $0xa8] sm:$0xff]
    %v44 = vld [vmem:[%s1 + $0xb0] sm:$0xff]
    %v45 = vld [vmem:[%s1 + $0xb8] sm:$0xff]
    %v46 = vld [vmem:[%s1 + $0xc0] sm:$0xff]
    %v47 = vld [vmem:[%s1 + $0xc8] sm:$0xff]
    %v48 = vld [vmem:[%s1 + $0xd0] sm:$0xff]
    %v49 = vld [vmem:[%s1 + $0xd8] sm:$0xff]
    %v50 = vld [vmem:[%s1 + $0xe0] sm:$0xff]
    %v51 = vld [vmem:[%s1 + $0xe8] sm:$0xff]
    %v52 = vld [vmem:[%s1 + $0xf0] sm:$0xff]
    %v53 = vld [vmem:[%s1 + $0xf8] sm:$0xff]
    %v54 = vld [vmem:[%s2] sm:$0x3]
    %v56 = vperm.slane %v54, 0
    %v57 = vperm.slane %v54, 1
    %60 = vmatpush.msra.mxu0 %v52
    %61 = vmatpush.msra.mxu0 %v50
    %62 = vmatpush.msra.mxu0 %v48
    %63 = vmatpush.msra.mxu0 %v46
    %64 = vmatpush.msra.mxu0 %v44
    %65 = vmatpush.msra.mxu0 %v42
    %66 = vmatpush.msra.mxu0 %v40
    %67 = vmatpush.msra.mxu0 %v38
    %68 = vmatpush.msra.mxu0 %v36
    %69 = vmatpush.msra.mxu0 %v34
    %70 = vmatpush.msra.mxu0 %v32
    %71 = vmatpush.msra.mxu0 %v30
    %72 = vmatpush.msra.mxu0 %v28
    %73 = vmatpush.msra.mxu0 %v26
    %74 = vmatpush.msra.mxu0 %v24
    %75 = vmatpush.msra.mxu0 %v22
    %76 = vmatmul.f32.gmra.mxu0 %v21
    %v77 = vpop.f32.mrf.mxu0
    %v78 = vadd.f32 %v56, %v77
    %79 = vdwg.mxu0
    %80 = vmatpush.msra.mxu0 %v53
    %81 = vmatpush.msra.mxu0 %v51
    %82 = vmatpush.msra.mxu0 %v49
    %83 = vmatpush.msra.mxu0 %v47
    %84 = vmatpush.msra.mxu0 %v45
    %85 = vmatpush.msra.mxu0 %v43
    %86 = vmatpush.msra.mxu0 %v41
    %87 = vmatpush.msra.mxu0 %v39
    %88 = vmatpush.msra.mxu0 %v37
    %89 = vmatpush.msra.mxu0 %v35
    %90 = vmatpush.msra.mxu0 %v33
    %91 = vmatpush.msra.mxu0 %v31
    %92 = vmatpush.msra.mxu0 %v29
    %93 = vmatpush.msra.mxu0 %v27
    %94 = vmatpush.msra.mxu0 %v25
    %95 = vmatpush.msra.mxu0 %v23
    %96 = vmatmul.f32.gmra.mxu0 %v21
    %v97 = vpop.f32.mrf.mxu0
    %v98 = vadd.f32 %v57, %v97
    %99 = vdwg.mxu0
    %v100 = vmax.f32 %v78, 0.0
    %v101 = vmax.f32 %v98, 0.0
    %v102 = vld [vmem:[%s3] sm:$0xff]
    %v103 = vld [vmem:[%s3 + $0x8] sm:$0xff]
    %v104 = vld [vmem:[%s3 + $0x10] sm:$0xff]
    %v105 = vld [vmem:[%s3 + $0x18] sm:$0xff]
    %v106 = vld [vmem:[%s3 + $0x20] sm:$0xff]
    %v107 = vld [vmem:[%s3 + $0x28] sm:$0xff]
    %v108 = vld [vmem:[%s3 + $0x30] sm:$0xff]
    %v109 = vld [vmem:[%s3 + $0x38] sm:$0xff]
    %v110 = vld [vmem:[%s3 + $0x40] sm:$0xff]
    %v111 = vld [vmem:[%s3 + $0x48] sm:$0xff]
    %v112 = vld [vmem:[%s3 + $0x50] sm:$0xff]
    %v113 = vld [vmem:[%s3 + $0x58] sm:$0xff]
    %v114 = vld [vmem:[%s3 + $0x60] sm:$0xff]
    %v115 = vld [vmem:[%s3 + $0x68] sm:$0xff]
    %v116 = vld [vmem:[%s3 + $0x70] sm:$0xff]
    %v117 = vld [vmem:[%s3 + $0x78] sm:$0xff]
    %v118 = vld [vmem:[%s3 + $0x80] sm:$0xff]
    %v119 = vld [vmem:[%s3 + $0x88] sm:$0xff]
    %v120 = vld [vmem:[%s3 + $0x90] sm:$0xff]
    %v121 = vld [vmem:[%s3 + $0x98] sm:$0xff]
    %v122 = vld [vmem:[%s3 + $0xa0] sm:$0xff]
    %v123 = vld [vmem:[%s3 + $0xa8] sm:$0xff]
    %v124 = vld [vmem:[%s3 + $0xb0] sm:$0xff]
    %v125 = vld [vmem:[%s3 + $0xb8] sm:$0xff]
    %v126 = vld [vmem:[%s3 + $0xc0] sm:$0xff]
    %v127 = vld [vmem:[%s3 + $0xc8] sm:$0xff]
    %v128 = vld [vmem:[%s3 + $0xd0] sm:$0xff]
    %v129 = vld [vmem:[%s3 + $0xd8] sm:$0xff]
    %v130 = vld [vmem:[%s3 + $0xe0] sm:$0xff]
    %v131 = vld [vmem:[%s3 + $0xe8] sm:$0xff]
    %v132 = vld [vmem:[%s3 + $0xf0] sm:$0xff]
    %v133 = vld [vmem:[%s3 + $0xf8] sm:$0xff]
    %v134 = vld [vmem:[%s4] sm:$0x1]
    %v136 = vperm.slane %v134, 0
    %138 = vmatpush.msra.mxu0 %v117
    %139 = vmatpush.msra.mxu0 %v116
    %140 = vmatpush.msra.mxu0 %v115
    %141 = vmatpush.msra.mxu0 %v114
    %142 = vmatpush.msra.mxu0 %v113
    %143 = vmatpush.msra.mxu0 %v112
    %144 = vmatpush.msra.mxu0 %v111
    %145 = vmatpush.msra.mxu0 %v110
    %146 = vmatpush.msra.mxu0 %v109
    %147 = vmatpush.msra.mxu0 %v108
    %148 = vmatpush.msra.mxu0 %v107
    %149 = vmatpush.msra.mxu0 %v106
    %150 = vmatpush.msra.mxu0 %v105
    %151 = vmatpush.msra.mxu0 %v104
    %152 = vmatpush.msra.mxu0 %v103
    %153 = vmatpush.msra.mxu0 %v102
    %154 = vmatmul.f32.gmra.mxu0 %v100
    %v155 = vpop.f32.mrf.mxu0
    %v156 = vadd.f32 %v136, %v155
    %157 = vdwg.mxu0
    %158 = vmatpush.msra.mxu0 %v133
    %159 = vmatpush.msra.mxu0 %v132
    %160 = vmatpush.msra.mxu0 %v131
    %161 = vmatpush.msra.mxu0 %v130
    %162 = vmatpush.msra.mxu0 %v129
    %163 = vmatpush.msra.mxu0 %v128
    %164 = vmatpush.msra.mxu0 %v127
    %165 = vmatpush.msra.mxu0 %v126
    %166 = vmatpush.msra.mxu0 %v125
    %167 = vmatpush.msra.mxu0 %v124
    %168 = vmatpush.msra.mxu0 %v123
    %169 = vmatpush.msra.mxu0 %v122
    %170 = vmatpush.msra.mxu0 %v121
    %171 = vmatpush.msra.mxu0 %v120
    %172 = vmatpush.msra.mxu0 %v119
    %173 = vmatpush.msra.mxu0 %v118
    %174 = vmatmul.f32.gmra.mxu0 %v101
    %v175 = vpop.f32.mrf.mxu0
    %v176 = vadd.f32 %v156, %v175
    %177 = vdwg.mxu0
    %vm178 = vcmask 64512
    %179 = vst.msk [vmem:[#allocation2] sm:$0xff] %vm178, %v176
    // Predicated region
    $region22: #{tpu_custom_call.1} parent=1 // pred_check
      _
    $region23: #{tpu_custom_call.1} parent=1 // pred_check_branch
      %181 = sbr.rel (0) target = $region25
    $region24: #{tpu_custom_call.1} parent=1 // pred_region
      %183 = vsyncadd [#allocation3], 0
      %s185 = sshll.u32 [#allocation2], 4
      %s186 = int_to_ptr.vmem [resolvable:$true] %s185
      %s187 = sshll.u32 %s5, 4
      %s188 = int_to_ptr.hbm [resolvable:$true] %s187
      %190 = dma.vmem_to_hbm [thread:$0]  %s186, 128, %s188, [#allocation3]
    $region25: #{tpu_custom_call.1} parent=1 // pred_fallthru
      _
    // Predicated region
    $region26: #{tpu_custom_call.1} parent=1 // pred_check
      _
    $region27: #{tpu_custom_call.1} parent=1 // pred_check_branch
      %192 = sbr.rel (0) target = $region29
    $region28: #{tpu_custom_call.1} parent=1 // pred_region
      %194 = dma.done [#allocation3], 128
    $region29: #{tpu_custom_call.1} parent=1 // pred_fallthru
      _
    %195 = vsyncpa [#allocation3], 1

</llo_original>
